<compile_context>
chip_gen: v7x
topology: tpu7x:2x2x1
jax: 0.10.0
libtpu: 0.0.40
codegen_flags: <defaults>
</compile_context>

<pallas_src>
import functools

import jax
import jax.numpy as jnp
from jax import lax
from jax.experimental import pallas as pl
from jax.experimental.pallas import tpu as pltpu


def _pick_row_tile(n, *, lane_aligned=False):
    """Largest tile from a fixed candidate set that divides n, else n (full)."""
    cands = (512, 256, 128) if lane_aligned else (512, 256, 128, 64, 32, 16)
    for t in cands:
        if n % t == 0:
            return t
    return n


# ----------------------------------------------------------------------------
# Kernel 1: projection.  feat = x @ W ; el^T = AL_T . feat^T ; er = feat @ AR_P
# The attention vectors are packed block-diagonally host-side so ALL heads are
# covered by two full MXU matmuls (no M=1 micro-matmuls).
# ----------------------------------------------------------------------------
def _gat_project_kernel(x_ref, w_ref, alT_ref, arP_ref,
                        feat_ref, elT_ref, er_ref):
    feat = jnp.dot(x_ref[...], w_ref[...], preferred_element_type=jnp.float32)
    feat_ref[...] = feat
    # (H, H*Dout) contracted with (TM, H*Dout) on the feature axis -> (H, TM).
    elT_ref[...] = lax.dot_general(
        alT_ref[...], feat, (((1,), (1,)), ((), ())),
        preferred_element_type=jnp.float32)
    er_ref[...] = jnp.dot(feat, arP_ref[...],
                          preferred_element_type=jnp.float32)


# ----------------------------------------------------------------------------
# Kernel 2: masked edge-softmax + aggregation for one tile of destination rows.
# Requires every destination row to have >= 1 edge (self-loops guarantee this).
# ----------------------------------------------------------------------------
def _gat_attn_kernel(mask_ref, er_ref, feat_ref, elT_ref, b_ref, o_ref, *,
                     num_heads, out_feats, negative_slope, apply_relu):
    neg = mask_ref[...].astype(jnp.float32)     # (TM, N) additive 0 / -1e30
    er = er_ref[...]                            # (TM, H) dst logit halves
    elT = elT_ref[...]                          # (H, N)  src logit halves
    feat = feat_ref[...]                        # (N, H*Dout) source features
    bias = b_ref[...]                           # (1, H*Dout)

    outs = []
    for h in range(num_heads):                  # static unroll, H is small
        lo = h * out_feats
        fh = feat[:, lo:lo + out_feats]                        # (N, Dout)
        logits = er[:, h:h + 1] + elT[h:h + 1, :]              # (TM, N)
        # leaky-relu then the hoisted additive mask (no per-head selects).
        e = jnp.where(logits > 0.0, logits, negative_slope * logits) + neg
        m = jnp.max(e, axis=-1, keepdims=True)
        p = jnp.exp(e - m)                      # masked entries underflow to 0
        denom = jnp.sum(p, axis=-1, keepdims=True)
        # Aggregate with UNnormalized weights; rescale once per (row, feature).
        rst = jnp.dot(p, fh, preferred_element_type=jnp.float32)   # (TM, Dout)
        rst = rst * pl.reciprocal(denom, approx=True) \
            + bias[:, lo:lo + out_feats]
        if apply_relu:
            rst = jnp.maximum(rst, 0.0)
        outs.append(rst)
    # Single lane-dense store of all heads.
    o_ref[...] = jnp.concatenate(outs, axis=-1)


# ----------------------------------------------------------------------------
# Layer wrapper: two pallas_calls, row-tiled, 'parallel' grid axis.
# ----------------------------------------------------------------------------
def gat_conv(h, adj_mask_bias, p, *, block_rows=None):
    """One GATConv layer.  adj_mask_bias: (N, N) additive mask (0 where edge
    j->i exists, -1e30 otherwise), bf16.  Returns (N, H*Dout) float32."""
    N, din = h.shape
    H, dout = p["num_heads"], p["out_feats"]
    hd = H * dout

    # ---- projection + packed attention projections -------------------------
    tm_p = _pick_row_tile(N, lane_aligned=True)   # elT block lane dim == tm_p
    feat, elT, er = pl.pallas_call(
        _gat_project_kernel,
        out_shape=(jax.ShapeDtypeStruct((N, hd), jnp.float32),
                   jax.ShapeDtypeStruct((H, N), jnp.float32),
                   jax.ShapeDtypeStruct((N, H), jnp.float32)),
        grid=(N // tm_p,),
        in_specs=[
            pl.BlockSpec((tm_p, din), lambda i: (i, 0)),
            pl.BlockSpec((din, hd), lambda i: (0, 0)),
            pl.BlockSpec((H, hd), lambda i: (0, 0)),
            pl.BlockSpec((hd, H), lambda i: (0, 0)),
        ],
        out_specs=(
            pl.BlockSpec((tm_p, hd), lambda i: (i, 0)),
            pl.BlockSpec((H, tm_p), lambda i: (0, i)),
            pl.BlockSpec((tm_p, H), lambda i: (i, 0)),
        ),
        compiler_params=pltpu.CompilerParams(
            dimension_semantics=("parallel",)),
    )(h, p["W"], p["AL_T"], p["AR_P"])

    # ---- edge softmax + aggregation, tiled over destination rows -----------
    tm_a = block_rows if block_rows is not None else _pick_row_tile(N)
    assert N % tm_a == 0 and (tm_a % 16 == 0 or tm_a == N), \
        "block_rows must divide N and be a multiple of 16 (or == N)"
    kern = functools.partial(
        _gat_attn_kernel, num_heads=H, out_feats=dout,
        negative_slope=p["negative_slope"], apply_relu=p["apply_relu"])
    return pl.pallas_call(
        kern,
        out_shape=jax.ShapeDtypeStruct((N, hd), jnp.float32),
        grid=(N // tm_a,),
        in_specs=[
            pl.BlockSpec((tm_a, N), lambda i: (i, 0)),   # additive mask (bf16)
            pl.BlockSpec((tm_a, H), lambda i: (i, 0)),   # er (dst tile)
            pl.BlockSpec((N, hd), lambda i: (0, 0)),     # feat (resident)
            pl.BlockSpec((H, N), lambda i: (0, 0)),      # elT (resident)
            pl.BlockSpec((1, hd), lambda i: (0, 0)),     # bias
        ],
        out_specs=pl.BlockSpec((tm_a, hd), lambda i: (i, 0)),
        compiler_params=pltpu.CompilerParams(
            dimension_semantics=("parallel",)),
    )(adj_mask_bias, er, feat, elT, p["bias"])


def make_pallas_conv(adj, *, block_rows=None):
    """Bake the dense adjacency into a bf16 additive mask ONCE (shared by all
    layers) and return conv_fn(h, adj, p) compatible with gat_forward."""
    adj_bias = jnp.where(adj > 0.0, 0.0, -1e30).astype(jnp.bfloat16)

    def conv(h, _adj, p):
        return gat_conv(h, adj_bias, p, block_rows=block_rows)
    return conv


# ----------------------------------------------------------------------------
# Pure-JAX reference (same math, for correctness check).
# ----------------------------------------------------------------------------
def gat_conv_ref(h, adj, p):
    H, dout = p["num_heads"], p["out_feats"]
    N = h.shape[0]
    feat = (h @ p["W"]).reshape(N, H, dout)
    el = jnp.einsum("nhd,hd->nh", feat, p["attn_l"])
    er = jnp.einsum("nhd,hd->nh", feat, p["attn_r"])
    e = er[:, None, :] + el[None, :, :]                 # (dst, src, H)
    e = jnp.where(e > 0.0, e, p["negative_slope"] * e)
    mask = (adj > 0.0)[:, :, None]
    e = jnp.where(mask, e, -1e30)
    m = e.max(axis=1, keepdims=True)
    pexp = jnp.where(mask, jnp.exp(e - m), 0.0)
    alpha = pexp / pexp.sum(axis=1, keepdims=True)
    rst = jnp.einsum("ijh,jhd->ihd", alpha, feat)        # (N, H, Dout)
    rst = rst + p["bias"].reshape(1, H, dout)
    if p["apply_relu"]:
        rst = jnp.maximum(rst, 0.0)
    return rst.reshape(N, H * dout)


# ----------------------------------------------------------------------------
# Model: parameter init + forward (mirrors GAT.forward).
# ----------------------------------------------------------------------------
def init_gat_params(key, num_layers, input_dim, hidden_dim, output_dim,
                    num_heads=8, negative_slope=0.2):
    assert num_layers > 1
    per_head = hidden_dim // num_heads           # hidden_dim //= num_heads
    heads = [num_heads] * num_layers + [1]
    layer_dims = [(input_dim, per_head, heads[0], True)]
    for l in range(1, num_layers - 1):
        layer_dims.append((per_head * heads[l - 1], per_head, heads[l], True))
    layer_dims.append((per_head * heads[-2], output_dim, heads[-1], False))

    params = []
    for idx, (din, dout, H, act) in enumerate(layer_dims):
        kw, kl, kr, kb = jax.random.split(jax.random.fold_in(key, idx), 4)
        gain = (2.0 / (din + H * dout)) ** 0.5
        attn_l = 0.1 * jax.random.normal(kl, (H, dout), jnp.float32)
        attn_r = 0.1 * jax.random.normal(kr, (H, dout), jnp.float32)
        # Block-diagonal packings so all heads' attention projections are two
        # full MXU matmuls inside the kernel.
        eye = jnp.eye(H, dtype=jnp.float32)
        AL_T = (eye[:, :, None] * attn_l[None, :, :]).reshape(H, H * dout)
        AR_P = (eye[:, :, None] * attn_r[None, :, :]).reshape(H, H * dout).T
        params.append({
            "W": gain * jax.random.normal(kw, (din, H * dout), jnp.float32),
            "attn_l": attn_l, "attn_r": attn_r,
            "AL_T": AL_T, "AR_P": AR_P,
            "bias": 0.01 * jax.random.normal(kb, (1, H * dout), jnp.float32),
            "num_heads": H, "out_feats": dout,
            "negative_slope": negative_slope, "apply_relu": act,
        })
    return params


def gat_forward(adj, feats, params, conv_fn):
    h = feats
    h_list = []
    num_layers = len(params)
    for l, p in enumerate(params):
        out = conv_fn(h, adj, p)                        # (N, H*Dout), act applied
        if l != num_layers - 1:
            h = out                                     # == .flatten(1)
            h_list.append(h)
        else:
            H, dout = p["num_heads"], p["out_feats"]
            h = out.reshape(-1, H, dout).mean(axis=1)   # == .mean(1)
    return h_list, h


# ----------------------------------------------------------------------------
# Main
# ----------------------------------------------------------------------------
if __name__ == "__main__":
    N = 64              # number of graph nodes
    input_dim = 16
    hidden_dim = 64     # per-head = 64 // 8 = 8
    output_dim = 8
    num_heads = 8
    num_layers = 2

    key = jax.random.PRNGKey(0)
    k_feat, k_adj, k_par = jax.random.split(key, 3)

    feats = jax.random.normal(k_feat, (N, input_dim), jnp.float32)
    # Random sparse-ish adjacency + self-loops (so no zero in-degree nodes).
    adj = (jax.random.uniform(k_adj, (N, N)) < 0.25).astype(jnp.float32)
    adj = jnp.maximum(adj, jnp.eye(N, dtype=jnp.float32))

    params = init_gat_params(k_par, num_layers, input_dim, hidden_dim,
                             output_dim, num_heads=num_heads)

    # Pallas conv: adjacency baked once into a bf16 additive mask; attention
    # kernel tiled over destination rows (grid of 4 'parallel' steps here).
    pallas_conv = make_pallas_conv(adj, block_rows=16)

    h_list, h = gat_forward(adj, feats, params, pallas_conv)
    jax.block_until_ready(h)

    # Correctness check against pure-JAX reference (approx reciprocal +
    # deferred normalization -> slightly looser tolerance than exact f32).
    h_list_ref, h_ref = gat_forward(adj, feats, params, gat_conv_ref)
    for a, b in zip(h_list, h_list_ref):
        assert jnp.allclose(a, b, rtol=2e-3, atol=2e-3), "hidden layer mismatch"
    assert jnp.allclose(h, h_ref, rtol=2e-3, atol=2e-3), "output mismatch"
    assert h.shape == (N, output_dim)
    assert h_list[0].shape == (N, hidden_dim)

    print("KERNEL_OK")
</pallas_src>

<mosaic_0001>
module attributes {stable_mosaic.version = 11 : i64} {
  func.func @_gat_project_kernel(%arg0: i32, %arg1: memref<64x16xf32, #tpu.memory_space<vmem>>, %arg2: memref<16x64xf32, #tpu.memory_space<vmem>>, %arg3: memref<8x64xf32, #tpu.memory_space<vmem>>, %arg4: memref<64x8xf32, #tpu.memory_space<vmem>>, %arg5: memref<64x64xf32, #tpu.memory_space<vmem>>, %arg6: memref<8x64xf32, #tpu.memory_space<vmem>>, %arg7: memref<64x8xf32, #tpu.memory_space<vmem>>) attributes {dimension_semantics = [#tpu.dimension_semantics<parallel>], iteration_bounds = array<i64: 1>, scalar_prefetch = 0 : i64, scratch_operands = 0 : i64, tpu.core_type = #tpu.core_type<tc>, window_params = [{transform_indices = @transform_0, window_bounds = array<i64: 64, 16>}, {pipeline_mode = #tpu.pipeline_mode<synchronous>, transform_indices = @transform_1, window_bounds = array<i64: 16, 64>}, {pipeline_mode = #tpu.pipeline_mode<synchronous>, transform_indices = @transform_2, window_bounds = array<i64: 8, 64>}, {pipeline_mode = #tpu.pipeline_mode<synchronous>, transform_indices = @transform_3, window_bounds = array<i64: 64, 8>}, {transform_indices = @transform_4, window_bounds = array<i64: 64, 64>}, {transform_indices = @transform_5, window_bounds = array<i64: 8, 64>}, {transform_indices = @transform_6, window_bounds = array<i64: 64, 8>}]} {
    %c0 = arith.constant 0 : index
    %c0_0 = arith.constant 0 : index
    %0 = vector.load %arg1[%c0, %c0_0] : memref<64x16xf32, #tpu.memory_space<vmem>>, vector<64x16xf32>
    %c0_1 = arith.constant 0 : index
    %c0_2 = arith.constant 0 : index
    %1 = vector.load %arg2[%c0_1, %c0_2] : memref<16x64xf32, #tpu.memory_space<vmem>>, vector<16x64xf32>
    %cst = arith.constant dense<0.000000e+00> : vector<64x64xf32>
    %2 = tpu.matmul %0, %1, %cst {dimension_numbers = #tpu.dot_dimension_numbers<[1], [0], [0], [1], [0, 0, 1, 1], [], []>} : vector<64x16xf32>, vector<16x64xf32>, vector<64x64xf32> -> vector<64x64xf32>
    %c0_3 = arith.constant 0 : index
    %c0_4 = arith.constant 0 : index
    %3 = vector.load %arg5[%c0_3, %c0_4] : memref<64x64xf32, #tpu.memory_space<vmem>>, vector<64x64xf32>
    tpu.vector_store %arg5[%c0_3, %c0_4], %2 {strides = array<i32>} : memref<64x64xf32, #tpu.memory_space<vmem>>, vector<64x64xf32>,
    %c0_5 = arith.constant 0 : index
    %c0_6 = arith.constant 0 : index
    %4 = vector.load %arg3[%c0_5, %c0_6] : memref<8x64xf32, #tpu.memory_space<vmem>>, vector<8x64xf32>
    %cst_7 = arith.constant dense<0.000000e+00> : vector<8x64xf32>
    %5 = tpu.matmul %4, %2, %cst_7 {dimension_numbers = #tpu.dot_dimension_numbers<[1], [1], [0], [0], [0, 0, 1, 0], [], []>} : vector<8x64xf32>, vector<64x64xf32>, vector<8x64xf32> -> vector<8x64xf32>
    %c0_8 = arith.constant 0 : index
    %c0_9 = arith.constant 0 : index
    %6 = vector.load %arg6[%c0_8, %c0_9] : memref<8x64xf32, #tpu.memory_space<vmem>>, vector<8x64xf32>
    tpu.vector_store %arg6[%c0_8, %c0_9], %5 {strides = array<i32>} : memref<8x64xf32, #tpu.memory_space<vmem>>, vector<8x64xf32>,
    %c0_10 = arith.constant 0 : index
    %c0_11 = arith.constant 0 : index
    %7 = vector.load %arg4[%c0_10, %c0_11] : memref<64x8xf32, #tpu.memory_space<vmem>>, vector<64x8xf32>
    %cst_12 = arith.constant dense<0.000000e+00> : vector<64x8xf32>
    %8 = tpu.matmul %2, %7, %cst_12 {dimension_numbers = #tpu.dot_dimension_numbers<[1], [0], [0], [1], [0, 0, 1, 1], [], []>} : vector<64x64xf32>, vector<64x8xf32>, vector<64x8xf32> -> vector<64x8xf32>
    %c0_13 = arith.constant 0 : index
    %c0_14 = arith.constant 0 : index
    %9 = vector.load %arg7[%c0_13, %c0_14] : memref<64x8xf32, #tpu.memory_space<vmem>>, vector<64x8xf32>
    tpu.vector_store %arg7[%c0_13, %c0_14], %8 {strides = array<i32>} : memref<64x8xf32, #tpu.memory_space<vmem>>, vector<64x8xf32>,
    return
  }
  func.func @transform_0(%arg0: i32) -> (i32, i32) {
    %c0_i32 = arith.constant 0 : i32
    %c0_i32_0 = arith.constant 0 : i32
    return %arg0, %c0_i32 : i32, i32
  }
  func.func @transform_1(%arg0: i32) -> (i32, i32) {
    %c0_i32 = arith.constant 0 : i32
    %c0_i32_0 = arith.constant 0 : i32
    %c0_i32_1 = arith.constant 0 : i32
    return %c0_i32, %c0_i32_0 : i32, i32
  }
  func.func @transform_2(%arg0: i32) -> (i32, i32) {
    %c0_i32 = arith.constant 0 : i32
    %c0_i32_0 = arith.constant 0 : i32
    %c0_i32_1 = arith.constant 0 : i32
    return %c0_i32, %c0_i32_0 : i32, i32
  }
  func.func @transform_3(%arg0: i32) -> (i32, i32) {
    %c0_i32 = arith.constant 0 : i32
    %c0_i32_0 = arith.constant 0 : i32
    %c0_i32_1 = arith.constant 0 : i32
    return %c0_i32, %c0_i32_0 : i32, i32
  }
  func.func @transform_4(%arg0: i32) -> (i32, i32) {
    %c0_i32 = arith.constant 0 : i32
    %c0_i32_0 = arith.constant 0 : i32
    return %arg0, %c0_i32 : i32, i32
  }
  func.func @transform_5(%arg0: i32) -> (i32, i32) {
    %c0_i32 = arith.constant 0 : i32
    %c0_i32_0 = arith.constant 0 : i32
    return %c0_i32, %arg0 : i32, i32
  }
  func.func @transform_6(%arg0: i32) -> (i32, i32) {
    %c0_i32 = arith.constant 0 : i32
    %c0_i32_0 = arith.constant 0 : i32
    return %arg0, %c0_i32 : i32, i32
  }
}

</mosaic_0001>

<llo_original>
// kernel: tpu_custom_call.1
$region0: #{tpu_custom_call.1}
  #allocation0 [shape = 'u32[]', space=smem, size = 0x4, offset = 0x4, fixed_abs, tag = 'smem constant byte address 0x4 - core index']
  #allocation1 [shape = 'u32[144,128]{1,0:T(1,128)}', space=vmem, size = 0x12000, scoped, tag = 'internal scratch']
  %s0 = inlined_call_operand.vmem [shape: f32[64,16], index: 0, kind: input, shape index: {}]
  %s1 = inlined_call_operand.vmem [shape: f32[16,64], index: 1, kind: input, shape index: {}]
  %s2 = inlined_call_operand.vmem [shape: f32[8,64], index: 2, kind: input, shape index: {}]
  %s3 = inlined_call_operand.vmem [shape: f32[64,8], index: 3, kind: input, shape index: {}]
  %s4 = inlined_call_operand.hbm [shape: f32[64,64], index: 4, kind: output, shape index: {0}]
  %s5 = inlined_call_operand.hbm [shape: f32[8,64], index: 5, kind: output, shape index: {1}]
  %s6 = inlined_call_operand.vmem [shape: f32[64,8], index: 6, kind: output, shape index: {2}]
  %7 = xla_tuple %s4, %s5, %s6
  %s8 = sld [smem:[#allocation0]]
  $region42: #{tpu_custom_call.1} parent=0
    _
  %s10 = ssub.s32 1, %s8
  %s11 = scalar_select 0, %s10, %s8
  $region1: #{tpu_custom_call.1} parent=0
    #allocation2 [shape = 'u8[32768]{0}', space=vmem, size = 0x8000, scoped, tag = 'output window, operand 0, single buffered']
    #allocation3 [shape = 's32[1]{0}', space=sflag, size = 0x4, scoped, tag = 'scoped memory for tpu_custom_call.1']
    #allocation4 [shape = 'u8[4096]{0}', space=vmem, size = 0x1000, scoped, tag = 'output window, operand 1, single buffered']
    #allocation5 [shape = 's32[1]{0}', space=sflag, size = 0x4, scoped, tag = 'scoped memory for tpu_custom_call.1']
    %12 = vsyncpa [#allocation3], 0
    %13 = vsyncpa [#allocation5], 0
    // Predicated region
    $region2: #{tpu_custom_call.1} parent=1 // pred_check
      _
    $region3: #{tpu_custom_call.1} parent=1 // pred_check_branch
      %15 = sbr.rel (0) target = $region5
    $region4: #{tpu_custom_call.1} parent=1 // pred_region
      _
    $region5: #{tpu_custom_call.1} parent=1 // pred_fallthru
      _
    // Predicated region
    $region6: #{tpu_custom_call.1} parent=1 // pred_check
      _
    $region7: #{tpu_custom_call.1} parent=1 // pred_check_branch
      %17 = sbr.rel (0) target = $region9
    $region8: #{tpu_custom_call.1} parent=1 // pred_region
      _
    $region9: #{tpu_custom_call.1} parent=1 // pred_fallthru
      _
    // Predicated region
    $region10: #{tpu_custom_call.1} parent=1 // pred_check
      _
    $region11: #{tpu_custom_call.1} parent=1 // pred_check_branch
      %19 = sbr.rel (0) target = $region13
    $region12: #{tpu_custom_call.1} parent=1 // pred_region
      _
    $region13: #{tpu_custom_call.1} parent=1 // pred_fallthru
      _
    // Predicated region
    $region14: #{tpu_custom_call.1} parent=1 // pred_check
      _
    $region15: #{tpu_custom_call.1} parent=1 // pred_check_branch
      %21 = sbr.rel (0) target = $region17
    $region16: #{tpu_custom_call.1} parent=1 // pred_region
      _
    $region17: #{tpu_custom_call.1} parent=1 // pred_fallthru
      _
    %v22 = vld [vmem:[%s0] sm:$0xff]
    %v23 = vld [vmem:[%s0 + $0x8] sm:$0xff]
    %v24 = vld [vmem:[%s0 + $0x10] sm:$0xff]
    %v25 = vld [vmem:[%s0 + $0x18] sm:$0xff]
    %v26 = vld [vmem:[%s0 + $0x20] sm:$0xff]
    %v27 = vld [vmem:[%s0 + $0x28] sm:$0xff]
    %v28 = vld [vmem:[%s0 + $0x30] sm:$0xff]
    %v29 = vld [vmem:[%s0 + $0x38] sm:$0xff]
    %v30 = vld [vmem:[%s1] sm:$0xff]
    %v31 = vld [vmem:[%s1 + $0x8] sm:$0xff]
    %vm32 = vcmask 130048
    %v34 = vsel %vm32, %v22, 0
    %v37 = vsel %vm32, %v23, 0
    %v40 = vsel %vm32, %v24, 0
    %v43 = vsel %vm32, %v25, 0
    %v46 = vsel %vm32, %v26, 0
    %v49 = vsel %vm32, %v27, 0
    %v52 = vsel %vm32, %v28, 0
    %v55 = vsel %vm32, %v29, 0
    %57 = vmatprep.subr.mxu0 0.0
    %58 = vmatpush1.msra.mxu0 %v30
    %59 = vmatprep.subr.mxu0 0.0
    %60 = vmatpush1.msra.mxu0 %v31
    %61 = vmatprep.subr.mxu0 0.0
    %62 = vmatpush1.msra.mxu0 0.0
    %63 = vmatprep.subr.mxu0 0.0
    %64 = vmatpush1.msra.mxu0 0.0
    %65 = vmatprep.subr.mxu0 0.0
    %66 = vmatpush1.msra.mxu0 0.0
    %67 = vmatprep.subr.mxu0 0.0
    %68 = vmatpush1.msra.mxu0 0.0
    %69 = vmatprep.subr.mxu0 0.0
    %70 = vmatpush1.msra.mxu0 0.0
    %71 = vmatprep.subr.mxu0 0.0
    %72 = vmatpush1.msra.mxu0 0.0
    %73 = vmatprep.subr.mxu0 0.0
    %74 = vmatpush1.msra.mxu0 0.0
    %75 = vmatprep.subr.mxu0 0.0
    %76 = vmatpush1.msra.mxu0 0.0
    %77 = vmatprep.subr.mxu0 0.0
    %78 = vmatpush1.msra.mxu0 0.0
    %79 = vmatprep.subr.mxu0 0.0
    %80 = vmatpush1.msra.mxu0 0.0
    %81 = vmatprep.subr.mxu0 0.0
    %82 = vmatpush1.msra.mxu0 0.0
    %83 = vmatprep.subr.mxu0 0.0
    %84 = vmatpush1.msra.mxu0 0.0
    %85 = vmatprep.subr.mxu0 0.0
    %86 = vmatpush1.msra.mxu0 0.0
    %87 = vmatprep.subr.mxu0 0.0
    %88 = vmatpush1.msra.mxu0 0.0
    %89 = vmatprep.subr.mxu0 0.0
    %90 = vmatpush1.msra.mxu0 0.0
    %91 = vmatprep.subr.mxu0 0.0
    %92 = vmatpush1.msra.mxu0 0.0
    %93 = vmatprep.subr.mxu0 0.0
    %94 = vmatpush1.msra.mxu0 0.0
    %95 = vmatprep.subr.mxu0 0.0
    %96 = vmatpush1.msra.mxu0 0.0
    %97 = vmatprep.subr.mxu0 0.0
    %98 = vmatpush1.msra.mxu0 0.0
    %99 = vmatprep.subr.mxu0 0.0
    %100 = vmatpush1.msra.mxu0 0.0
    %101 = vmatprep.subr.mxu0 0.0
    %102 = vmatpush1.msra.mxu0 0.0
    %103 = vmatprep.subr.mxu0 0.0
    %104 = vmatpush1.msra.mxu0 0.0
    %105 = vmatprep.subr.mxu0 0.0
    %106 = vmatpush1.msra.mxu0 0.0
    %107 = vmatprep.subr.mxu0 0.0
    %108 = vmatpush1.msra.mxu0 0.0
    %109 = vmatprep.subr.mxu0 0.0
    %110 = vmatpush1.msra.mxu0 0.0
    %111 = vmatprep.subr.mxu0 0.0
    %112 = vmatpush1.msra.mxu0 0.0
    %113 = vmatprep.subr.mxu0 0.0
    %114 = vmatpush1.msra.mxu0 0.0
    %115 = vmatprep.subr.mxu0 0.0
    %116 = vmatpush1.msra.mxu0 0.0
    %117 = vmatprep.subr.mxu0 0.0
    %118 = vmatpush1.msra.mxu0 0.0
    %119 = vmatprep.subr.mxu0 0.0
    %120 = vmatpush1.msra.mxu0 0.0
    %121 = vmatprep.mubr.f32.mxu0 0.0
    %122 = vmatmul.mubr.f32.gmra.mrb[0].mxu0 %v34
    %v123 = vpop.f32.mrb[0].mxu0
    %v124 = vadd.f32 0.0, %v123
    %v125 = vpop.f32.mrb[0].mxu0
    %126 = vmatprep.mubr.f32.mxu0 0.0
    %127 = vmatmul.mubr.f32.gmra.mrb[0].mxu0 %v37
    %v128 = vpop.f32.mrb[0].mxu0
    %v129 = vadd.f32 0.0, %v128
    %v130 = vpop.f32.mrb[0].mxu0
    %131 = vmatprep.mubr.f32.mxu0 0.0
    %132 = vmatmul.mubr.f32.gmra.mrb[0].mxu0 %v40
    %v133 = vpop.f32.mrb[0].mxu0
    %v134 = vadd.f32 0.0, %v133
    %v135 = vpop.f32.mrb[0].mxu0
    %136 = vmatprep.mubr.f32.mxu0 0.0
    %137 = vmatmul.mubr.f32.gmra.mrb[0].mxu0 %v43
    %v138 = vpop.f32.mrb[0].mxu0
    %v139 = vadd.f32 0.0, %v138
    %v140 = vpop.f32.mrb[0].mxu0
    %141 = vmatprep.mubr.f32.mxu0 0.0
    %142 = vmatmul.mubr.f32.gmra.mrb[0].mxu0 %v46
    %v143 = vpop.f32.mrb[0].mxu0
    %v144 = vadd.f32 0.0, %v143
    %v145 = vpop.f32.mrb[0].mxu0
    %146 = vmatprep.mubr.f32.mxu0 0.0
    %147 = vmatmul.mubr.f32.gmra.mrb[0].mxu0 %v49
    %v148 = vpop.f32.mrb[0].mxu0
    %v149 = vadd.f32 0.0, %v148
    %v150 = vpop.f32.mrb[0].mxu0
    %151 = vmatprep.mubr.f32.mxu0 0.0
    %152 = vmatmul.mubr.f32.gmra.mrb[0].mxu0 %v52
    %v153 = vpop.f32.mrb[0].mxu0
    %v154 = vadd.f32 0.0, %v153
    %v155 = vpop.f32.mrb[0].mxu0
    %156 = vmatprep.mubr.f32.mxu0 0.0
    %157 = vmatmul.mubr.f32.gmra.mrb[0].mxu0 %v55
    %v158 = vpop.f32.mrb[0].mxu0
    %v159 = vadd.f32 0.0, %v158
    %v160 = vpop.f32.mrb[0].mxu0
    %161 = vdwg.mxu0
    %vm162 = vcmask 523264
    %163 = vst.msk [vmem:[#allocation2] sm:$0xff] %vm162, %v124
    %164 = vst.msk [vmem:[#allocation2 + $0x8] sm:$0xff] %vm162, %v129
    %165 = vst.msk [vmem:[#allocation2 + $0x10] sm:$0xff] %vm162, %v134
    %166 = vst.msk [vmem:[#allocation2 + $0x18] sm:$0xff] %vm162, %v139
    %167 = vst.msk [vmem:[#allocation2 + $0x20] sm:$0xff] %vm162, %v144
    %168 = vst.msk [vmem:[#allocation2 + $0x28] sm:$0xff] %vm162, %v149
    %169 = vst.msk [vmem:[#allocation2 + $0x30] sm:$0xff] %vm162, %v154
    %170 = vst.msk [vmem:[#allocation2 + $0x38] sm:$0xff] %vm162, %v159
    %v171 = vld [vmem:[%s2] sm:$0xff]
    %v173 = vsel %vm162, %v171, 0
    %v176 = vsel %vm162, %v124, 0
    %v179 = vsel %vm162, %v129, 0
    %v182 = vsel %vm162, %v134, 0
    %v185 = vsel %vm162, %v139, 0
    %v188 = vsel %vm162, %v144, 0
    %v191 = vsel %vm162, %v149, 0
    %v194 = vsel %vm162, %v154, 0
    %v197 = vsel %vm162, %v159, 0
    %199 = vmatprep.subr.mxu0 0.0
    %200 = vmatpush1.xpose.msra.mxu0 %v176
    %201 = vmatprep.subr.mxu0 0.0
    %202 = vmatpush1.xpose.msra.mxu0 %v179
    %203 = vmatprep.subr.mxu0 0.0
    %204 = vmatpush1.xpose.msra.mxu0 %v182
    %205 = vmatprep.subr.mxu0 0.0
    %206 = vmatpush1.xpose.msra.mxu0 %v185
    %207 = vmatprep.subr.mxu0 0.0
    %208 = vmatpush1.xpose.msra.mxu0 %v188
    %209 = vmatprep.subr.mxu0 0.0
    %210 = vmatpush1.xpose.msra.mxu0 %v191
    %211 = vmatprep.subr.mxu0 0.0
    %212 = vmatpush1.xpose.msra.mxu0 %v194
    %213 = vmatprep.subr.mxu0 0.0
    %214 = vmatpush1.xpose.msra.mxu0 %v197
    %215 = vmatprep.subr.mxu0 0.0
    %216 = vmatpush1.xpose.msra.mxu0 0.0
    %217 = vmatprep.subr.mxu0 0.0
    %218 = vmatpush1.xpose.msra.mxu0 0.0
    %219 = vmatprep.subr.mxu0 0.0
    %220 = vmatpush1.xpose.msra.mxu0 0.0
    %221 = vmatprep.subr.mxu0 0.0
    %222 = vmatpush1.xpose.msra.mxu0 0.0
    %223 = vmatprep.subr.mxu0 0.0
    %224 = vmatpush1.xpose.msra.mxu0 0.0
    %225 = vmatprep.subr.mxu0 0.0
    %226 = vmatpush1.xpose.msra.mxu0 0.0
    %227 = vmatprep.subr.mxu0 0.0
    %228 = vmatpush1.xpose.msra.mxu0 0.0
    %229 = vmatprep.subr.mxu0 0.0
    %230 = vmatpush1.xpose.msra.mxu0 0.0
    %231 = vmatprep.subr.mxu0 0.0
    %232 = vmatpush1.xpose.msra.mxu0 0.0
    %233 = vmatprep.subr.mxu0 0.0
    %234 = vmatpush1.xpose.msra.mxu0 0.0
    %235 = vmatprep.subr.mxu0 0.0
    %236 = vmatpush1.xpose.msra.mxu0 0.0
    %237 = vmatprep.subr.mxu0 0.0
    %238 = vmatpush1.xpose.msra.mxu0 0.0
    %239 = vmatprep.subr.mxu0 0.0
    %240 = vmatpush1.xpose.msra.mxu0 0.0
    %241 = vmatprep.subr.mxu0 0.0
    %242 = vmatpush1.xpose.msra.mxu0 0.0
    %243 = vmatprep.subr.mxu0 0.0
    %244 = vmatpush1.xpose.msra.mxu0 0.0
    %245 = vmatprep.subr.mxu0 0.0
    %246 = vmatpush1.xpose.msra.mxu0 0.0
    %247 = vmatprep.subr.mxu0 0.0
    %248 = vmatpush1.xpose.msra.mxu0 0.0
    %249 = vmatprep.subr.mxu0 0.0
    %250 = vmatpush1.xpose.msra.mxu0 0.0
    %251 = vmatprep.subr.mxu0 0.0
    %252 = vmatpush1.xpose.msra.mxu0 0.0
    %253 = vmatprep.subr.mxu0 0.0
    %254 = vmatpush1.xpose.msra.mxu0 0.0
    %255 = vmatprep.subr.mxu0 0.0
    %256 = vmatpush1.xpose.msra.mxu0 0.0
    %257 = vmatprep.subr.mxu0 0.0
    %258 = vmatpush1.xpose.msra.mxu0 0.0
    %259 = vmatprep.subr.mxu0 0.0
    %260 = vmatpush1.xpose.msra.mxu0 0.0
    %261 = vmatprep.subr.mxu0 0.0
    %262 = vmatpush1.xpose.msra.mxu0 0.0
    %263 = vmatprep.mubr.f32.mxu0 0.0
    %264 = vmatmul.mubr.f32.gmra.mrb[0].mxu0 %v173
    %v265 = vpop.f32.mrb[0].mxu0
    %v266 = vadd.f32 0.0, %v265
    %v267 = vpop.f32.mrb[0].mxu0
    %268 = vdwg.mxu0
    %269 = vst.msk [vmem:[#allocation4] sm:$0xff] %vm162, %v266
    %v270 = vld [vmem:[%s3] sm:$0xff]
    %v271 = vld [vmem:[%s3 + $0x8] sm:$0xff]
    %v272 = vld [vmem:[%s3 + $0x10] sm:$0xff]
    %v273 = vld [vmem:[%s3 + $0x18] sm:$0xff]
    %v274 = vld [vmem:[%s3 + $0x20] sm:$0xff]
    %v275 = vld [vmem:[%s3 + $0x28] sm:$0xff]
    %v276 = vld [vmem:[%s3 + $0x30] sm:$0xff]
    %v277 = vld [vmem:[%s3 + $0x38] sm:$0xff]
    %278 = vmatprep.subr.mxu0 0.0
    %279 = vmatpush1.msra.mxu0 %v270
    %280 = vmatprep.subr.mxu0 0.0
    %281 = vmatpush1.msra.mxu0 %v271
    %282 = vmatprep.subr.mxu0 0.0
    %283 = vmatpush1.msra.mxu0 %v272
    %284 = vmatprep.subr.mxu0 0.0
    %285 = vmatpush1.msra.mxu0 %v273
    %286 = vmatprep.subr.mxu0 0.0
    %287 = vmatpush1.msra.mxu0 %v274
    %288 = vmatprep.subr.mxu0 0.0
    %289 = vmatpush1.msra.mxu0 %v275
    %290 = vmatprep.subr.mxu0 0.0
    %291 = vmatpush1.msra.mxu0 %v276
    %292 = vmatprep.subr.mxu0 0.0
    %293 = vmatpush1.msra.mxu0 %v277
    %294 = vmatprep.subr.mxu0 0.0
    %295 = vmatpush1.msra.mxu0 0.0
    %296 = vmatprep.subr.mxu0 0.0
    %297 = vmatpush1.msra.mxu0 0.0
    %298 = vmatprep.subr.mxu0 0.0
    %299 = vmatpush1.msra.mxu0 0.0
    %300 = vmatprep.subr.mxu0 0.0
    %301 = vmatpush1.msra.mxu0 0.0
    %302 = vmatprep.subr.mxu0 0.0
    %303 = vmatpush1.msra.mxu0 0.0
    %304 = vmatprep.subr.mxu0 0.0
    %305 = vmatpush1.msra.mxu0 0.0
    %306 = vmatprep.subr.mxu0 0.0
    %307 = vmatpush1.msra.mxu0 0.0
    %308 = vmatprep.subr.mxu0 0.0
    %309 = vmatpush1.msra.mxu0 0.0
    %310 = vmatprep.subr.mxu0 0.0
    %311 = vmatpush1.msra.mxu0 0.0
    %312 = vmatprep.subr.mxu0 0.0
    %313 = vmatpush1.msra.mxu0 0.0
    %314 = vmatprep.subr.mxu0 0.0
    %315 = vmatpush1.msra.mxu0 0.0
    %316 = vmatprep.subr.mxu0 0.0
    %317 = vmatpush1.msra.mxu0 0.0
    %318 = vmatprep.subr.mxu0 0.0
    %319 = vmatpush1.msra.mxu0 0.0
    %320 = vmatprep.subr.mxu0 0.0
    %321 = vmatpush1.msra.mxu0 0.0
    %322 = vmatprep.subr.mxu0 0.0
    %323 = vmatpush1.msra.mxu0 0.0
    %324 = vmatprep.subr.mxu0 0.0
    %325 = vmatpush1.msra.mxu0 0.0
    %326 = vmatprep.subr.mxu0 0.0
    %327 = vmatpush1.msra.mxu0 0.0
    %328 = vmatprep.subr.mxu0 0.0
    %329 = vmatpush1.msra.mxu0 0.0
    %330 = vmatprep.subr.mxu0 0.0
    %331 = vmatpush1.msra.mxu0 0.0
    %332 = vmatprep.subr.mxu0 0.0
    %333 = vmatpush1.msra.mxu0 0.0
    %334 = vmatprep.subr.mxu0 0.0
    %335 = vmatpush1.msra.mxu0 0.0
    %336 = vmatprep.subr.mxu0 0.0
    %337 = vmatpush1.msra.mxu0 0.0
    %338 = vmatprep.subr.mxu0 0.0
    %339 = vmatpush1.msra.mxu0 0.0
    %340 = vmatprep.subr.mxu0 0.0
    %341 = vmatpush1.msra.mxu0 0.0
    %342 = vmatprep.mubr.f32.mxu0 0.0
    %343 = vmatmul.mubr.f32.gmra.mrb[0].mxu0 %v176
    %v344 = vpop.f32.mrb[0].mxu0
    %v345 = vadd.f32 0.0, %v344
    %v346 = vpop.f32.mrb[0].mxu0
    %347 = vmatprep.mubr.f32.mxu0 0.0
    %348 = vmatmul.mubr.f32.gmra.mrb[0].mxu0 %v179
    %v349 = vpop.f32.mrb[0].mxu0
    %v350 = vadd.f32 0.0, %v349
    %v351 = vpop.f32.mrb[0].mxu0
    %352 = vmatprep.mubr.f32.mxu0 0.0
    %353 = vmatmul.mubr.f32.gmra.mrb[0].mxu0 %v182
    %v354 = vpop.f32.mrb[0].mxu0
    %v355 = vadd.f32 0.0, %v354
    %v356 = vpop.f32.mrb[0].mxu0
    %357 = vmatprep.mubr.f32.mxu0 0.0
    %358 = vmatmul.mubr.f32.gmra.mrb[0].mxu0 %v185
    %v359 = vpop.f32.mrb[0].mxu0
    %v360 = vadd.f32 0.0, %v359
    %v361 = vpop.f32.mrb[0].mxu0
    %362 = vmatprep.mubr.f32.mxu0 0.0
    %363 = vmatmul.mubr.f32.gmra.mrb[0].mxu0 %v188
    %v364 = vpop.f32.mrb[0].mxu0
    %v365 = vadd.f32 0.0, %v364
    %v366 = vpop.f32.mrb[0].mxu0
    %367 = vmatprep.mubr.f32.mxu0 0.0
    %368 = vmatmul.mubr.f32.gmra.mrb[0].mxu0 %v191
    %v369 = vpop.f32.mrb[0].mxu0
    %v370 = vadd.f32 0.0, %v369
    %v371 = vpop.f32.mrb[0].mxu0
    %372 = vmatprep.mubr.f32.mxu0 0.0
    %373 = vmatmul.mubr.f32.gmra.mrb[0].mxu0 %v194
    %v374 = vpop.f32.mrb[0].mxu0
    %v375 = vadd.f32 0.0, %v374
    %v376 = vpop.f32.mrb[0].mxu0
    %377 = vmatprep.mubr.f32.mxu0 0.0
    %378 = vmatmul.mubr.f32.gmra.mrb[0].mxu0 %v197
    %v379 = vpop.f32.mrb[0].mxu0
    %v380 = vadd.f32 0.0, %v379
    %v381 = vpop.f32.mrb[0].mxu0
    %382 = vdwg.mxu0
    %vm383 = vcmask 64512
    %384 = vst.msk [vmem:[%s6] sm:$0xff] %vm383, %v345
    %385 = vst.msk [vmem:[%s6 + $0x8] sm:$0xff] %vm383, %v350
    %386 = vst.msk [vmem:[%s6 + $0x10] sm:$0xff] %vm383, %v355
    %387 = vst.msk [vmem:[%s6 + $0x18] sm:$0xff] %vm383, %v360
    %388 = vst.msk [vmem:[%s6 + $0x20] sm:$0xff] %vm383, %v365
    %389 = vst.msk [vmem:[%s6 + $0x28] sm:$0xff] %vm383, %v370
    %390 = vst.msk [vmem:[%s6 + $0x30] sm:$0xff] %vm383, %v375
    %391 = vst.msk [vmem:[%s6 + $0x38] sm:$0xff] %vm383, %v380
    // Predicated region
    $region18: #{tpu_custom_call.1} parent=1 // pred_check
      _
    $region19: #{tpu_custom_call.1} parent=1 // pred_check_branch
      %393 = sbr.rel (0) target = $region21
    $region20: #{tpu_custom_call.1} parent=1 // pred_region
      %s395 = ssub.s32 1024, 1024
      %396 = vsyncadd [#allocation3], %s395
      %s397 = sshll.u32 [#allocation2], 4
      %s398 = int_to_ptr.vmem [resolvable:$true] %s397
      %403 = dma.vmem_to_hbm [thread:$0]  %s398, 1024, %s4, [#allocation3], 128, 128, 8
    $region21: #{tpu_custom_call.1} parent=1 // pred_fallthru
      _
    // Predicated region
    $region22: #{tpu_custom_call.1} parent=1 // pred_check
      _
    $region23: #{tpu_custom_call.1} parent=1 // pred_check_branch
      %405 = sbr.rel (0) target = $region25
    $region24: #{tpu_custom_call.1} parent=1 // pred_region
      %s407 = ssub.s32 128, 128
      %408 = vsyncadd [#allocation5], %s407
      %s410 = sshll.u32 [#allocation4], 4
      %s411 = int_to_ptr.vmem [resolvable:$true] %s410
      %413 = dma.vmem_to_hbm [thread:$0]  %s411, 128, %s5, [#allocation5]
    $region25: #{tpu_custom_call.1} parent=1 // pred_fallthru
      _
    // Predicated region
    $region26: #{tpu_custom_call.1} parent=1 // pred_check
      _
    $region27: #{tpu_custom_call.1} parent=1 // pred_check_branch
      %415 = sbr.rel (0) target = $region29
    $region28: #{tpu_custom_call.1} parent=1 // pred_region
      _
    $region29: #{tpu_custom_call.1} parent=1 // pred_fallthru
      _
    // Predicated region
    $region30: #{tpu_custom_call.1} parent=1 // pred_check
      _
    $region31: #{tpu_custom_call.1} parent=1 // pred_check_branch
      %417 = sbr.rel (0) target = $region33
    $region32: #{tpu_custom_call.1} parent=1 // pred_region
      %418 = dma.done [#allocation3], 1024
    $region33: #{tpu_custom_call.1} parent=1 // pred_fallthru
      _
    // Predicated region
    $region34: #{tpu_custom_call.1} parent=1 // pred_check
      _
    $region35: #{tpu_custom_call.1} parent=1 // pred_check_branch
      %420 = sbr.rel (0) target = $region37
    $region36: #{tpu_custom_call.1} parent=1 // pred_region
      %421 = dma.done [#allocation5], 128
    $region37: #{tpu_custom_call.1} parent=1 // pred_fallthru
      _
    // Predicated region
    $region38: #{tpu_custom_call.1} parent=1 // pred_check
      _
    $region39: #{tpu_custom_call.1} parent=1 // pred_check_branch
      %423 = sbr.rel (0) target = $region41
    $region40: #{tpu_custom_call.1} parent=1 // pred_region
      _
    $region41: #{tpu_custom_call.1} parent=1 // pred_fallthru
      _
    %424 = vsyncpa [#allocation3], 1
    %425 = vsyncpa [#allocation5], 1

</llo_original>
